<compile_context>
chip_gen: v6e
topology: v6e:2x2x1
jax: 0.10.0
libtpu: 0.0.40
codegen_flags: <defaults>
</compile_context>

<pallas_src>
import jax
import jax.numpy as jnp
from jax.experimental import pallas as pl
from jax.experimental.pallas import tpu as pltpu

VOCAB = 200  # nn.Embedding(200, dim)

_BLOCK_BUDGET = 8 * 1024 * 1024        # per output block (double-buffered)
_VMEM_LIMIT = 40 * 1024 * 1024         # safe on v5e/v6e (128 MiB) and v7x (64 MiB)
_SPLIT_THRESHOLD = 4 * 1024 * 1024     # force >=2 chunks above this (v7x megacore)


def _round_down(x, m):
    return max(m, (x // m) * m)


def _pos_embed_kernel(rows_ref, out_ref):
    # rows_ref: (ts, td) tile of the embedding rows table[0:S]
    # out_ref : (bt, ts, td) output chunk -- broadcast the rows over the batch dim
    out_ref[...] = jnp.broadcast_to(rows_ref[...][None], out_ref.shape)


def position_embedding(seq_h, pos_embed_table):
    """seq_h: (B, S, D) (only shape is used); pos_embed_table: (VOCAB, D)."""
    B, S, D = seq_h.shape
    vocab, d_table = pos_embed_table.shape
    assert d_table == D, "hidden dim mismatch between seq_h and embedding table"
    assert S <= vocab, "sequence length exceeds embedding table size (200)"

    dtype = pos_embed_table.dtype
    itemsize = dtype.itemsize

    # arange-gather == contiguous slice of the first S rows (cheap XLA slice).
    rows = jax.lax.slice(pos_embed_table, (0, 0), (S, D))  # (S, D)

    # --- Tile sizing ------------------------------------------------------
    # Lane (D) tile: full D unless a single (8, D) strip blows the budget.
    if 8 * D * itemsize <= _BLOCK_BUDGET:
        td = D
    else:
        td = _round_down(_BLOCK_BUDGET // (8 * itemsize), 128)
        td = min(td, _round_down(D, 128))
    # Sublane (S) tile: full S unless a single (S, td) tile blows the budget.
    if S * td * itemsize <= _BLOCK_BUDGET:
        ts = S
    else:
        ts = _round_down(_BLOCK_BUDGET // (td * itemsize), 8)
    # Batch chunk: as many rows of (ts, td) tiles as fit the budget.
    tile_bytes = ts * td * itemsize
    bt = max(1, min(B, _BLOCK_BUDGET // tile_bytes))

    grid_b = pl.cdiv(B, bt)
    grid_s = pl.cdiv(S, ts)
    grid_d = pl.cdiv(D, td)

    # v7x: make sure a non-trivial output gets >= 2 parallel chunks so both
    # TensorCores share the HBM writeback.
    total_out_bytes = B * S * D * itemsize
    if (grid_b * grid_s * grid_d == 1 and B >= 2
            and total_out_bytes > _SPLIT_THRESHOLD):
        bt = pl.cdiv(B, 2)
        grid_b = pl.cdiv(B, bt)

    grid = (grid_b, grid_s, grid_d)

    out = pl.pallas_call(
        _pos_embed_kernel,
        out_shape=jax.ShapeDtypeStruct((B, S, D), dtype),
        grid_spec=pltpu.PrefetchScalarGridSpec(
            num_scalar_prefetch=0,
            grid=grid,
            in_specs=[
                # Table rows: constant over the batch axis, tiled over (S, D).
                pl.BlockSpec((ts, td), lambda i, j, k: (j, k)),
            ],
            out_specs=pl.BlockSpec((bt, ts, td), lambda i, j, k: (i, j, k)),
        ),
        compiler_params=pltpu.CompilerParams(
            dimension_semantics=("parallel", "parallel", "parallel"),
            vmem_limit_bytes=_VMEM_LIMIT,
        ),
        cost_estimate=pl.CostEstimate(
            flops=0,
            transcendentals=0,
            bytes_accessed=(S * D + B * S * D) * itemsize,
        ),
    )(rows)

    return out


def position_embedding_ref(seq_h, pos_embed_table):
    B, S, _ = seq_h.shape
    position_ids = jnp.arange(S)
    pe = pos_embed_table[position_ids]  # (S, D)
    return jnp.broadcast_to(pe[None], (B, S, pos_embed_table.shape[1]))


if __name__ == "__main__":
    B, S, D = 2, 8, 32  # batch=2, seq=8, hidden dim=32

    key = jax.random.PRNGKey(0)
    k_table, k_seq = jax.random.split(key)

    # Deterministic "trained" embedding table (normal init, like nn.Embedding).
    pos_embed_table = jax.random.normal(k_table, (VOCAB, D), dtype=jnp.float32)
    # seq_h's values are never read by the forward pass; only its shape matters.
    seq_h = jax.random.normal(k_seq, (B, S, D), dtype=jnp.float32)

    out = position_embedding(seq_h, pos_embed_table)
    out = jax.block_until_ready(out)

    ref = position_embedding_ref(seq_h, pos_embed_table)
    assert out.shape == (B, S, D)
    assert jnp.allclose(out, ref), "Pallas output mismatch vs reference"

    print("KERNEL_OK")
</pallas_src>

<mosaic_0001>
module attributes {stable_mosaic.version = 11 : i64} {
  func.func @_pos_embed_kernel(%arg0: i32, %arg1: i32, %arg2: i32, %arg3: memref<8x32xf32, #tpu.memory_space<vmem>>, %arg4: memref<2x8x32xf32, #tpu.memory_space<vmem>>) attributes {dimension_semantics = [#tpu.dimension_semantics<parallel>, #tpu.dimension_semantics<parallel>, #tpu.dimension_semantics<parallel>], iteration_bounds = array<i64: 1, 1, 1>, scalar_prefetch = 0 : i64, scratch_operands = 0 : i64, tpu.core_type = #tpu.core_type<tc>, window_params = [{transform_indices = @transform_0, window_bounds = array<i64: 8, 32>}, {transform_indices = @transform_1, window_bounds = array<i64: 2, 8, 32>}]} {
    %c0 = arith.constant 0 : index
    %c0_0 = arith.constant 0 : index
    %0 = vector.load %arg3[%c0, %c0_0] : memref<8x32xf32, #tpu.memory_space<vmem>>, vector<8x32xf32>
    %1 = vector.shape_cast %0 : vector<8x32xf32> to vector<1x8x32xf32>
    %2 = vector.shape_cast %1 : vector<1x8x32xf32> to vector<1x8x32xf32>
    %3 = vector.broadcast %2 : vector<1x8x32xf32> to vector<2x8x32xf32>
    %c0_1 = arith.constant 0 : index
    %c0_2 = arith.constant 0 : index
    %c0_3 = arith.constant 0 : index
    %4 = vector.load %arg4[%c0_1, %c0_2, %c0_3] : memref<2x8x32xf32, #tpu.memory_space<vmem>>, vector<2x8x32xf32>
    tpu.vector_store %arg4[%c0_1, %c0_2, %c0_3], %3 {strides = array<i32>} : memref<2x8x32xf32, #tpu.memory_space<vmem>>, vector<2x8x32xf32>,
    return
  }
  func.func @transform_0(%arg0: i32, %arg1: i32, %arg2: i32) -> (i32, i32) {
    %c0_i32 = arith.constant 0 : i32
    return %arg1, %arg2 : i32, i32
  }
  func.func @transform_1(%arg0: i32, %arg1: i32, %arg2: i32) -> (i32, i32, i32) {
    %c0_i32 = arith.constant 0 : i32
    return %arg0, %arg1, %arg2 : i32, i32, i32
  }
}

</mosaic_0001>

<llo_original>
// kernel: tpu_custom_call.1
$region0: #{tpu_custom_call.1}
  #allocation0 [shape = 'u32[]', space=smem, size = 0x4, offset = 0x4, fixed_abs, tag = 'smem constant byte address 0x4 - core index']
  #allocation1 [shape = 'u32[144,128]{1,0:T(1,128)}', space=vmem, size = 0x12000, scoped, tag = 'internal scratch']
  %s0 = inlined_call_operand.hbm [shape: f32[8,32], index: 0, kind: input, shape index: {}]
  %s1 = inlined_call_operand.hbm [shape: f32[2,8,32], index: 1, kind: output, shape index: {}]
  %s2 = sld [smem:[#allocation0]]
  $region18: #{tpu_custom_call.1} parent=0
    _
  %s4 = ssub.s32 1, %s2
  %s5 = scalar_select 0, %s4, %s2
  $region1: #{tpu_custom_call.1} parent=0
    #allocation2 [shape = 'u8[4096]{0}', space=vmem, size = 0x1000, scoped, tag = 'input window, operand 0, single buffered']
    #allocation3 [shape = 's32[1]{0}', space=sflag, size = 0x4, scoped, tag = 'scoped memory for tpu_custom_call.1']
    #allocation4 [shape = 's32[1]{0}', space=sflag, size = 0x4, scoped, tag = 'scoped memory for tpu_custom_call.1']
    #allocation5 [shape = 'u8[8192]{0}', space=vmem, size = 0x2000, scoped, tag = 'output window, operand 0, single buffered']
    %6 = vsyncpa [#allocation3], 0
    %7 = vsyncpa [#allocation4], 0
    // Predicated region
    $region2: #{tpu_custom_call.1} parent=1 // pred_check
      _
    $region3: #{tpu_custom_call.1} parent=1 // pred_check_branch
      %9 = sbr.rel (0) target = $region5
    $region4: #{tpu_custom_call.1} parent=1 // pred_region
      %s11 = ssub.s32 128, 128
      %12 = vsyncadd [#allocation3], %s11
      %s14 = sshll.u32 [#allocation2], 4
      %s15 = int_to_ptr.vmem [resolvable:$true] %s14
      %17 = dma.hbm_to_vmem [thread:$0]  %s0, 128, %s15, [#allocation3]
    $region5: #{tpu_custom_call.1} parent=1 // pred_fallthru
      _
    // Predicated region
    $region6: #{tpu_custom_call.1} parent=1 // pred_check
      _
    $region7: #{tpu_custom_call.1} parent=1 // pred_check_branch
      %19 = sbr.rel (0) target = $region9
    $region8: #{tpu_custom_call.1} parent=1 // pred_region
      %20 = dma.done [#allocation3], 128
    $region9: #{tpu_custom_call.1} parent=1 // pred_fallthru
      _
    %v21 = vld [vmem:[#allocation2] sm:$0xff]
    %vm22 = vcmask 261120
    %23 = vst.msk [vmem:[#allocation5] sm:$0xff] %vm22, %v21
    %24 = vst.msk [vmem:[#allocation5 + $0x8] sm:$0xff] %vm22, %v21
    // Predicated region
    $region10: #{tpu_custom_call.1} parent=1 // pred_check
      _
    $region11: #{tpu_custom_call.1} parent=1 // pred_check_branch
      %26 = sbr.rel (0) target = $region13
    $region12: #{tpu_custom_call.1} parent=1 // pred_region
      %s28 = ssub.s32 256, 256
      %29 = vsyncadd [#allocation4], %s28
      %s30 = sshll.u32 [#allocation5], 4
      %s31 = int_to_ptr.vmem [resolvable:$true] %s30
      %36 = dma.vmem_to_hbm [thread:$0]  %s31, 256, %s1, [#allocation4], 128, 128, 8
    $region13: #{tpu_custom_call.1} parent=1 // pred_fallthru
      _
    // Predicated region
    $region14: #{tpu_custom_call.1} parent=1 // pred_check
      _
    $region15: #{tpu_custom_call.1} parent=1 // pred_check_branch
      %38 = sbr.rel (0) target = $region17
    $region16: #{tpu_custom_call.1} parent=1 // pred_region
      %39 = dma.done [#allocation4], 256
    $region17: #{tpu_custom_call.1} parent=1 // pred_fallthru
      _
    %40 = vsyncpa [#allocation3], 1
    %41 = vsyncpa [#allocation4], 1

</llo_original>
